<compile_context>
chip_gen: v6e
topology: v6e:2x2x1
jax: 0.10.0
libtpu: 0.0.40
codegen_flags: <defaults>
</compile_context>

<pallas_src>
import math

import jax
import jax.numpy as jnp
from jax import lax
from jax.experimental import pallas as pl
from jax.experimental.pallas import tpu as pltpu


def _attn_kernel(x_ref, mask_ref, wqkv_ref, bqkv_ref, wp_ref, bp_ref,
                 out_ref, acc_ref):
    h = pl.program_id(1)
    n_head = pl.num_programs(1)

    @pl.when(h == 0)
    def _():
        acc_ref[...] = jnp.zeros_like(acc_ref)

    xb = x_ref[0]                      # (T, C)   bf16
    m = mask_ref[0]                    # (1, T)   int32, 0 == masked key

    # Fused per-head QKV projection: one (T, C) @ (C, 3D) MXU matmul, f32 accumulation.
    qkv = jnp.dot(xb, wqkv_ref[0], preferred_element_type=jnp.float32)
    qkv = qkv + bqkv_ref[0]            # (T, 3D) f32; 1/sqrt(D) already folded into Wq/bq

    d = wp_ref.shape[1]                # head dim (static)
    q = qkv[:, :d].astype(jnp.bfloat16)
    k = qkv[:, d:2 * d].astype(jnp.bfloat16)
    v = qkv[:, 2 * d:].astype(jnp.bfloat16)

    # Scores: contract the feature axis of both operands (no explicit k.T / XLU transpose).
    att = lax.dot_general(q, k, dimension_numbers=(((1,), (1,)), ((), ())),
                          preferred_element_type=jnp.float32)        # (T, T) f32

    # Key-padding mask, exactly like masked_fill(mask == 0, -1e10).
    att = jnp.where(m == 0, jnp.float32(-1e10), att)

    # Softmax along the key axis (f32); EUP reciprocal instead of VALU divide.
    att = att - jnp.max(att, axis=-1, keepdims=True)
    p = jnp.exp(att)
    p = p * pl.reciprocal(jnp.sum(p, axis=-1, keepdims=True), approx=True)

    # y_h = att @ v, projected straight into the f32 output accumulator.
    yh = jnp.dot(p.astype(jnp.bfloat16), v, preferred_element_type=jnp.float32)
    acc_ref[...] += jnp.dot(yh.astype(jnp.bfloat16), wp_ref[0],
                            preferred_element_type=jnp.float32)

    @pl.when(h == n_head - 1)
    def _():
        out_ref[0] = (acc_ref[...] + bp_ref[...]).astype(out_ref.dtype)


def causal_self_attention(x, mask, params, n_head):
    """x: (B, T, C) float32; mask: (B, T), 0 == masked-out key position."""
    B, T, C = x.shape
    assert C % n_head == 0
    D = C // n_head
    scale = 1.0 / math.sqrt(D)

    wq, bq, wk, bk, wv, bv, wp, bp = params

    # Fold the attention scale into the query projection (free at runtime).
    wq = wq * scale
    bq = bq * scale

    # Per-head fused QKV weight (n_head, C, 3*D) and bias (n_head, 1, 3*D).
    def heads_w(w):      # (C, C) -> (n_head, C, D): head-h output columns
        return jnp.transpose(w.reshape(C, n_head, D), (1, 0, 2))

    def heads_b(b):      # (1, C) -> (n_head, 1, D)
        return jnp.transpose(b.reshape(1, n_head, D), (1, 0, 2))

    wqkv = jnp.concatenate([heads_w(wq), heads_w(wk), heads_w(wv)], axis=-1)
    bqkv = jnp.concatenate([heads_b(bq), heads_b(bk), heads_b(bv)], axis=-1)

    # Per-head rows of the output projection: (n_head, D, C).
    wp_h = wp.reshape(n_head, D, C)

    # bf16 operands for the MXU; biases / softmax / accumulation stay f32.
    x_bf = x.astype(jnp.bfloat16)
    wqkv = wqkv.astype(jnp.bfloat16)
    wp_h = wp_h.astype(jnp.bfloat16)

    mask3 = mask.reshape(B, 1, T).astype(jnp.int32)

    return pl.pallas_call(
        _attn_kernel,
        out_shape=jax.ShapeDtypeStruct((B, T, C), x.dtype),
        grid_spec=pltpu.PrefetchScalarGridSpec(
            num_scalar_prefetch=0,
            grid=(B, n_head),
            in_specs=[
                pl.BlockSpec((1, T, C), lambda b, h: (b, 0, 0)),       # x (bf16)
                pl.BlockSpec((1, 1, T), lambda b, h: (b, 0, 0)),       # key-padding mask
                pl.BlockSpec((1, C, 3 * D), lambda b, h: (h, 0, 0)),   # fused QKV weight, head h
                pl.BlockSpec((1, 1, 3 * D), lambda b, h: (h, 0, 0)),   # fused QKV bias,   head h
                pl.BlockSpec((1, D, C), lambda b, h: (h, 0, 0)),       # proj rows,        head h
                pl.BlockSpec((1, C), lambda b, h: (0, 0)),             # proj bias
            ],
            out_specs=pl.BlockSpec((1, T, C), lambda b, h: (b, 0, 0)),
            scratch_shapes=[pltpu.VMEM((T, C), jnp.float32)],
        ),
        compiler_params=pltpu.CompilerParams(
            dimension_semantics=("parallel", "arbitrary")),
    )(x_bf, mask3, wqkv, bqkv, wp_h, bp)


def init_params(key, n_embd):
    # Deterministic synthetic init (shapes match nn.Linear(n_embd, n_embd) x4).
    ks = jax.random.split(key, 8)
    s = 1.0 / math.sqrt(n_embd)

    def w(k):  # stored (C_in, C_out): kernel does x @ W + b  ==  x @ W_pt.T + b
        return jax.random.uniform(k, (n_embd, n_embd), jnp.float32, -s, s)

    def b(k):  # stored (1, C) for TPU-friendly 2D layout
        return jax.random.uniform(k, (1, n_embd), jnp.float32, -s, s)

    return (w(ks[0]), b(ks[1]),   # query
            w(ks[2]), b(ks[3]),   # key
            w(ks[4]), b(ks[5]),   # value
            w(ks[6]), b(ks[7]))   # proj


def _reference(x, mask, params, n_head):
    """Pure-JAX f32 replica of the PyTorch forward (eval mode, dropout = identity)."""
    B, T, C = x.shape
    D = C // n_head
    wq, bq, wk, bk, wv, bv, wp, bp = params
    q = (x @ wq + bq).reshape(B, T, n_head, D).transpose(0, 2, 1, 3)
    k = (x @ wk + bk).reshape(B, T, n_head, D).transpose(0, 2, 1, 3)
    v = (x @ wv + bv).reshape(B, T, n_head, D).transpose(0, 2, 1, 3)
    att = jnp.einsum("bhqd,bhkd->bhqk", q, k) * (1.0 / math.sqrt(D))
    att = jnp.where(mask[:, None, None, :] == 0, jnp.float32(-1e10), att)
    att = jax.nn.softmax(att, axis=-1)
    y = jnp.einsum("bhqk,bhkd->bhqd", att, v)
    y = y.transpose(0, 2, 1, 3).reshape(B, T, C)
    return y @ wp + bp


if __name__ == "__main__":
    B, T, C, n_head = 2, 8, 32, 4

    key = jax.random.PRNGKey(0)
    kx, kp = jax.random.split(key)

    x = jax.random.normal(kx, (B, T, C), jnp.float32)
    # mask: 1 = keep, 0 = masked-out key position (pad a few trailing positions)
    mask = jnp.ones((B, T), jnp.int32)
    mask = mask.at[0, T - 2:].set(0)
    mask = mask.at[1, T - 3:].set(0)

    params = init_params(kp, C)

    y = causal_self_attention(x, mask, params, n_head)
    jax.block_until_ready(y)
    assert y.shape == (B, T, C)

    # Loose tolerance: kernel feeds bf16 operands to the MXU (f32 accumulation/softmax).
    y_ref = _reference(x, mask, params, n_head)
    err = float(jnp.max(jnp.abs(y - y_ref)))
    assert err < 1e-1, f"max abs err {err}"
    print("KERNEL_OK")
</pallas_src>

<mosaic_0001>
module attributes {stable_mosaic.version = 11 : i64} {
  func.func @_attn_kernel(%arg0: i32, %arg1: i32, %arg2: memref<1x8x32xbf16, #tpu.memory_space<vmem>>, %arg3: memref<1x1x8xi32, #tpu.memory_space<vmem>>, %arg4: memref<1x32x24xbf16, #tpu.memory_space<vmem>>, %arg5: memref<1x1x24xf32, #tpu.memory_space<vmem>>, %arg6: memref<1x8x32xbf16, #tpu.memory_space<vmem>>, %arg7: memref<1x32xf32, #tpu.memory_space<vmem>>, %arg8: memref<1x8x32xf32, #tpu.memory_space<vmem>>, %arg9: memref<8x32xf32, #tpu.memory_space<vmem>>) attributes {dimension_semantics = [#tpu.dimension_semantics<parallel>, #tpu.dimension_semantics<arbitrary>], iteration_bounds = array<i64: 2, 4>, scalar_prefetch = 0 : i64, scratch_operands = 1 : i64, tpu.core_type = #tpu.core_type<tc>, window_params = [{transform_indices = @transform_0, window_bounds = array<i64: 1, 8, 32>}, {transform_indices = @transform_1, window_bounds = array<i64: 1, 1, 8>}, {transform_indices = @transform_2, window_bounds = array<i64: 1, 32, 24>}, {transform_indices = @transform_3, window_bounds = array<i64: 1, 1, 24>}, {transform_indices = @transform_4, window_bounds = array<i64: 1, 8, 32>}, {pipeline_mode = #tpu.pipeline_mode<synchronous>, transform_indices = @transform_5, window_bounds = array<i64: 1, 32>}, {transform_indices = @transform_6, window_bounds = array<i64: 1, 8, 32>}]} {
    %c0_i32 = arith.constant 0 : i32
    %0 = arith.cmpi eq, %arg1, %c0_i32 : i32
    %1 = arith.extui %0 : i1 to i32
    %c0_i32_0 = arith.constant 0 : i32
    %2 = arith.cmpi ne, %1, %c0_i32_0 : i32
    scf.if %2 {
      %cst_27 = arith.constant 0.000000e+00 : f32
      %49 = vector.broadcast %cst_27 : f32 to vector<8x32xf32>
      %c0_28 = arith.constant 0 : index
      %c0_29 = arith.constant 0 : index
      %50 = vector.load %arg9[%c0_28, %c0_29] : memref<8x32xf32, #tpu.memory_space<vmem>>, vector<8x32xf32>
      tpu.vector_store %arg9[%c0_28, %c0_29], %49 {strides = array<i32>} : memref<8x32xf32, #tpu.memory_space<vmem>>, vector<8x32xf32>,
    } else {
    }
    %c0 = arith.constant 0 : index
    %c0_1 = arith.constant 0 : index
    %c0_2 = arith.constant 0 : index
    %3 = vector.load %arg2[%c0, %c0_1, %c0_2] : memref<1x8x32xbf16, #tpu.memory_space<vmem>>, vector<1x8x32xbf16>
    %4 = vector.shape_cast %3 : vector<1x8x32xbf16> to vector<8x32xbf16>
    %c0_3 = arith.constant 0 : index
    %c0_4 = arith.constant 0 : index
    %c0_5 = arith.constant 0 : index
    %5 = vector.load %arg3[%c0_3, %c0_4, %c0_5] : memref<1x1x8xi32, #tpu.memory_space<vmem>>, vector<1x1x8xi32>
    %6 = vector.shape_cast %5 : vector<1x1x8xi32> to vector<1x8xi32>
    %c0_6 = arith.constant 0 : index
    %c0_7 = arith.constant 0 : index
    %c0_8 = arith.constant 0 : index
    %7 = vector.load %arg4[%c0_6, %c0_7, %c0_8] : memref<1x32x24xbf16, #tpu.memory_space<vmem>>, vector<1x32x24xbf16>
    %8 = vector.shape_cast %7 : vector<1x32x24xbf16> to vector<32x24xbf16>
    %cst = arith.constant dense<0.000000e+00> : vector<8x24xf32>
    %9 = tpu.matmul %4, %8, %cst {dimension_numbers = #tpu.dot_dimension_numbers<[1], [0], [0], [1], [0, 0, 1, 1], [], []>} : vector<8x32xbf16>, vector<32x24xbf16>, vector<8x24xf32> -> vector<8x24xf32>
    %c0_9 = arith.constant 0 : index
    %c0_10 = arith.constant 0 : index
    %c0_11 = arith.constant 0 : index
    %10 = vector.load %arg5[%c0_9, %c0_10, %c0_11] : memref<1x1x24xf32, #tpu.memory_space<vmem>>, vector<1x1x24xf32>
    %11 = vector.shape_cast %10 : vector<1x1x24xf32> to vector<1x24xf32>
    %12 = vector.broadcast %11 : vector<1x24xf32> to vector<8x24xf32>
    %13 = arith.addf %9, %12 : vector<8x24xf32>
    %14 = vector.extract_strided_slice %13 {offsets = [0, 0], sizes = [8, 8], strides = [1, 1]} : vector<8x24xf32> to vector<8x8xf32>
    %15 = arith.truncf %14 : vector<8x8xf32> to vector<8x8xbf16>
    %16 = vector.extract_strided_slice %13 {offsets = [0, 8], sizes = [8, 8], strides = [1, 1]} : vector<8x24xf32> to vector<8x8xf32>
    %17 = arith.truncf %16 : vector<8x8xf32> to vector<8x8xbf16>
    %18 = vector.extract_strided_slice %13 {offsets = [0, 16], sizes = [8, 8], strides = [1, 1]} : vector<8x24xf32> to vector<8x8xf32>
    %19 = arith.truncf %18 : vector<8x8xf32> to vector<8x8xbf16>
    %cst_12 = arith.constant dense<0.000000e+00> : vector<8x8xf32>
    %20 = tpu.matmul %15, %17, %cst_12 {dimension_numbers = #tpu.dot_dimension_numbers<[1], [1], [0], [0], [0, 0, 1, 0], [], []>} : vector<8x8xbf16>, vector<8x8xbf16>, vector<8x8xf32> -> vector<8x8xf32>
    %c0_i32_13 = arith.constant 0 : i32
    %21 = vector.broadcast %c0_i32_13 : i32 to vector<1x8xi32>
    %22 = arith.cmpi eq, %6, %21 : vector<1x8xi32>
    %cst_14 = arith.constant -1.000000e+10 : f32
    %23 = vector.shape_cast %22 : vector<1x8xi1> to vector<1x8xi1>
    %24 = vector.broadcast %23 : vector<1x8xi1> to vector<8x8xi1>
    %25 = vector.broadcast %cst_14 : f32 to vector<8x8xf32>
    %26 = arith.select %24, %25, %20 : vector<8x8xi1>, vector<8x8xf32>
    %cst_15 = arith.constant dense<0xFF800000> : vector<8xf32>
    %27 = vector.multi_reduction <maximumf>, %26, %cst_15 [1] : vector<8x8xf32> to vector<8xf32>
    %28 = vector.shape_cast %27 : vector<8xf32> to vector<8x1xf32>
    %29 = vector.broadcast %28 : vector<8x1xf32> to vector<8x8xf32>
    %30 = arith.subf %26, %29 : vector<8x8xf32>
    %31 = math.exp %30 : vector<8x8xf32>
    %cst_16 = arith.constant dense<0.000000e+00> : vector<8xf32>
    %32 = vector.multi_reduction <add>, %31, %cst_16 [1] : vector<8x8xf32> to vector<8xf32>
    %33 = vector.shape_cast %32 : vector<8xf32> to vector<8x1xf32>
    %34 = tpu.reciprocal %33 {approx = true} : vector<8x1xf32> -> vector<8x1xf32>
    %35 = vector.broadcast %34 : vector<8x1xf32> to vector<8x8xf32>
    %36 = arith.mulf %31, %35 : vector<8x8xf32>
    %37 = arith.truncf %36 : vector<8x8xf32> to vector<8x8xbf16>
    %cst_17 = arith.constant dense<0.000000e+00> : vector<8x8xf32>
    %38 = tpu.matmul %37, %19, %cst_17 {dimension_numbers = #tpu.dot_dimension_numbers<[1], [0], [0], [1], [0, 0, 1, 1], [], []>} : vector<8x8xbf16>, vector<8x8xbf16>, vector<8x8xf32> -> vector<8x8xf32>
    %c0_18 = arith.constant 0 : index
    %c0_19 = arith.constant 0 : index
    %39 = vector.load %arg9[%c0_18, %c0_19] : memref<8x32xf32, #tpu.memory_space<vmem>>, vector<8x32xf32>
    %40 = arith.truncf %38 : vector<8x8xf32> to vector<8x8xbf16>
    %c0_20 = arith.constant 0 : index
    %c0_21 = arith.constant 0 : index
    %c0_22 = arith.constant 0 : index
    %41 = vector.load %arg6[%c0_20, %c0_21, %c0_22] : memref<1x8x32xbf16, #tpu.memory_space<vmem>>, vector<1x8x32xbf16>
    %42 = vector.shape_cast %41 : vector<1x8x32xbf16> to vector<8x32xbf16>
    %cst_23 = arith.constant dense<0.000000e+00> : vector<8x32xf32>
    %43 = tpu.matmul %40, %42, %cst_23 {dimension_numbers = #tpu.dot_dimension_numbers<[1], [0], [0], [1], [0, 0, 1, 1], [], []>} : vector<8x8xbf16>, vector<8x32xbf16>, vector<8x32xf32> -> vector<8x32xf32>
    %44 = arith.addf %39, %43 : vector<8x32xf32>
    %c0_24 = arith.constant 0 : index
    %c0_25 = arith.constant 0 : index
    %45 = vector.load %arg9[%c0_24, %c0_25] : memref<8x32xf32, #tpu.memory_space<vmem>>, vector<8x32xf32>
    tpu.vector_store %arg9[%c0_24, %c0_25], %44 {strides = array<i32>} : memref<8x32xf32, #tpu.memory_space<vmem>>, vector<8x32xf32>,
    %c3_i32 = arith.constant 3 : i32
    %46 = arith.cmpi eq, %arg1, %c3_i32 : i32
    %47 = arith.extui %46 : i1 to i32
    %c0_i32_26 = arith.constant 0 : i32
    %48 = arith.cmpi ne, %47, %c0_i32_26 : i32
    scf.if %48 {
      %c0_27 = arith.constant 0 : index
      %c0_28 = arith.constant 0 : index
      %49 = vector.load %arg9[%c0_27, %c0_28] : memref<8x32xf32, #tpu.memory_space<vmem>>, vector<8x32xf32>
      %c0_29 = arith.constant 0 : index
      %c0_30 = arith.constant 0 : index
      %50 = vector.load %arg7[%c0_29, %c0_30] : memref<1x32xf32, #tpu.memory_space<vmem>>, vector<1x32xf32>
      %51 = vector.broadcast %50 : vector<1x32xf32> to vector<8x32xf32>
      %52 = arith.addf %49, %51 : vector<8x32xf32>
      %c0_31 = arith.constant 0 : index
      %c0_32 = arith.constant 0 : index
      %c0_33 = arith.constant 0 : index
      %53 = vector.load %arg8[%c0_31, %c0_32, %c0_33] : memref<1x8x32xf32, #tpu.memory_space<vmem>>, vector<1x8x32xf32>
      %54 = vector.shape_cast %53 : vector<1x8x32xf32> to vector<8x32xf32>
      %55 = vector.shape_cast %52 : vector<8x32xf32> to vector<1x8x32xf32>
      tpu.vector_store %arg8[%c0_31, %c0_32, %c0_33], %55 {strides = array<i32>} : memref<1x8x32xf32, #tpu.memory_space<vmem>>, vector<1x8x32xf32>,
    } else {
    }
    return
  }
  func.func @transform_0(%arg0: i32, %arg1: i32) -> (i32, i32, i32) {
    %c0_i32 = arith.constant 0 : i32
    %c0_i32_0 = arith.constant 0 : i32
    %c0_i32_1 = arith.constant 0 : i32
    return %arg0, %c0_i32, %c0_i32_0 : i32, i32, i32
  }
  func.func @transform_1(%arg0: i32, %arg1: i32) -> (i32, i32, i32) {
    %c0_i32 = arith.constant 0 : i32
    %c0_i32_0 = arith.constant 0 : i32
    %c0_i32_1 = arith.constant 0 : i32
    return %arg0, %c0_i32, %c0_i32_0 : i32, i32, i32
  }
  func.func @transform_2(%arg0: i32, %arg1: i32) -> (i32, i32, i32) {
    %c0_i32 = arith.constant 0 : i32
    %c0_i32_0 = arith.constant 0 : i32
    %c0_i32_1 = arith.constant 0 : i32
    return %arg1, %c0_i32, %c0_i32_0 : i32, i32, i32
  }
  func.func @transform_3(%arg0: i32, %arg1: i32) -> (i32, i32, i32) {
    %c0_i32 = arith.constant 0 : i32
    %c0_i32_0 = arith.constant 0 : i32
    %c0_i32_1 = arith.constant 0 : i32
    return %arg1, %c0_i32, %c0_i32_0 : i32, i32, i32
  }
  func.func @transform_4(%arg0: i32, %arg1: i32) -> (i32, i32, i32) {
    %c0_i32 = arith.constant 0 : i32
    %c0_i32_0 = arith.constant 0 : i32
    %c0_i32_1 = arith.constant 0 : i32
    return %arg1, %c0_i32, %c0_i32_0 : i32, i32, i32
  }
  func.func @transform_5(%arg0: i32, %arg1: i32) -> (i32, i32) {
    %c0_i32 = arith.constant 0 : i32
    %c0_i32_0 = arith.constant 0 : i32
    %c0_i32_1 = arith.constant 0 : i32
    return %c0_i32, %c0_i32_0 : i32, i32
  }
  func.func @transform_6(%arg0: i32, %arg1: i32) -> (i32, i32, i32) {
    %c0_i32 = arith.constant 0 : i32
    %c0_i32_0 = arith.constant 0 : i32
    %c0_i32_1 = arith.constant 0 : i32
    return %arg0, %c0_i32, %c0_i32_0 : i32, i32, i32
  }
}

</mosaic_0001>

<llo_original>
// kernel: tpu_custom_call.1
$region0: #{tpu_custom_call.1}
  #allocation0 [shape = 'u32[]', space=smem, size = 0x4, offset = 0x4, fixed_abs, tag = 'smem constant byte address 0x4 - core index']
  #allocation1 [shape = 'u32[144,128]{1,0:T(1,128)}', space=vmem, size = 0x12000, scoped, tag = 'internal scratch']
  #allocation2 [shape = 'f32[8,32]{1,0:T(8,128)}', space=vmem, size = 0x1000, scoped, tag = 'scratch operand']
  %s0 = inlined_call_operand.vmem [shape: bf16[2,8,32], index: 0, kind: input, shape index: {}]
  %s1 = inlined_call_operand.vmem [shape: s32[2,1,8], index: 1, kind: input, shape index: {}]
  %s2 = inlined_call_operand.vmem [shape: bf16[4,32,24], index: 2, kind: input, shape index: {}]
  %s3 = inlined_call_operand.vmem [shape: f32[4,1,24], index: 3, kind: input, shape index: {}]
  %s4 = inlined_call_operand.vmem [shape: bf16[4,8,32], index: 4, kind: input, shape index: {}]
  %s5 = inlined_call_operand.vmem [shape: f32[1,32], index: 5, kind: input, shape index: {}]
  %s6 = inlined_call_operand.hbm [shape: f32[2,8,32], index: 6, kind: output, shape index: {}]
  %s7 = sld [smem:[#allocation0]]
  $region65: #{tpu_custom_call.1} parent=0
    _
  %s9 = ssub.s32 1, %s7
  %s10 = scalar_select 0, %s9, %s7
  $region1: #{tpu_custom_call.1} parent=0
    #allocation3 [shape = 'u8[8192]{0}', space=vmem, size = 0x2000, scoped, tag = 'output window, operand 0']
    #allocation4 [shape = 's32[2]{0}', space=sflag, size = 0x8, scoped, tag = 'scoped memory for tpu_custom_call.1']
    %11 = vsyncpa [#allocation4], 0
    %s12 = scalar_lea.sflag [#allocation4], 1
    %13 = vsyncpa %s12, 0
    loop: start=0, step=1, limit=10
    $region2: #{tpu_custom_call.1} parent=1 // loop_pre_header
      _
    $region3: #{tpu_custom_call.1} parent=1 // loop_header
      %s15 = sphi 0, %s19
      %p16 = scmp.ge.s32.totalorder %s15, 10
      %s22 = sphi 0, %s34
      %s23 = sphi 0, %s30
      %s24 = sphi 0, %s22
      %s25 = sphi 0, %s23
      %s26 = sphi 0, %s24
      %s27 = sphi 0, %s25
      %s37 = sphi 0, %s39
      %s40 = sphi 0, %s37
      %s41 = sphi 0, %s40
      %s57 = sphi 0, %s41
      %s63 = sphi 0, %s65
      %s66 = sphi 0, %s63
      %s67 = sphi 0, %s66
      %s83 = sphi 0, %s67
      %s89 = sphi 0, %s91
      %s92 = sphi 0, %s89
      %s93 = sphi 0, %s92
      %s109 = sphi 0, %s93
      %s115 = sphi 0, %s117
      %s118 = sphi 0, %s115
      %s119 = sphi 0, %s118
      %s135 = sphi 0, %s119
      %s141 = sphi 0, %s143
      %s144 = sphi 0, %s141
      %s145 = sphi 0, %s144
      %s161 = sphi 0, %s145
      %s165 = sphi 0, %s165
      %s167 = sphi 0, %s165
      %s168 = sphi 0, %s167
      %s182 = sphi 0, %s168
      %s188 = sphi 0, %s190
      %s191 = sphi 0, %s188
      %s192 = sphi 0, %s191
      %s208 = sphi 0, %s192
    $region4: #{tpu_custom_call.1} parent=1 // loop_header_branch
      %18 = sbr.rel (%p16) target = $region8
    $region5: #{tpu_custom_call.1} parent=1 // loop_body
      %s20 = ssub.s32 %s15, 1
      %s21 = ssub.s32 %s15, 2
      %s28 = sadd.s32 1, %s23
      %p29 = scmp.ge.s32.totalorder %s28, 4
      %s30 = scalar_select %p29, 0, %s28
      %s31 = sadd.s32 1, %s22
      %s32 = scalar_select %p29, %s31, %s22
      %p33 = scmp.ge.s32.totalorder %s32, 2
      %s34 = scalar_select %p33, 0, %s32
      %s35 = ssub.s32 %s22, %s34
      %p36 = scmp.eq.s32.totalorder %s35, 0
      %s38 = sadd.s32 %s37, 1
      %s39 = scalar_select %p36, %s37, %s38
      %p42 = pneg %p36
      %p43 = scmp.eq.s32.totalorder %s15, 7
      %p44 = por %p42, %p43
      %p45 = scmp.ne.s32.totalorder %s37, %s40
      %p46 = scmp.eq.s32.totalorder %s15, 0
      %p47 = por %p45, %p46
      %p48 = scmp.ne.s32.totalorder %s37, %s40
      %p49 = scmp.eq.s32.totalorder %s20, 7
      %p50 = por %p48, %p49
      %p51 = scmp.ne.s32.totalorder %s40, %s41
      %p52 = scmp.eq.s32.totalorder %s20, 0
      %p53 = por %p51, %p52
      %p54 = scmp.ne.s32.totalorder %s40, %s41
      %p55 = scmp.eq.s32.totalorder %s21, 7
      %p56 = por %p54, %p55
      %p58 = scmp.ne.s32.totalorder %s41, %s57
      %p59 = scmp.eq.s32.totalorder %s21, 0
      %p60 = por %p58, %p59
      %s61 = ssub.s32 %s22, %s34
      %p62 = scmp.eq.s32.totalorder %s61, 0
      %s64 = sadd.s32 %s63, 1
      %s65 = scalar_select %p62, %s63, %s64
      %p68 = pneg %p62
      %p69 = scmp.eq.s32.totalorder %s15, 7
      %p70 = por %p68, %p69
      %p71 = scmp.ne.s32.totalorder %s63, %s66
      %p72 = scmp.eq.s32.totalorder %s15, 0
      %p73 = por %p71, %p72
      %p74 = scmp.ne.s32.totalorder %s63, %s66
      %p75 = scmp.eq.s32.totalorder %s20, 7
      %p76 = por %p74, %p75
      %p77 = scmp.ne.s32.totalorder %s66, %s67
      %p78 = scmp.eq.s32.totalorder %s20, 0
      %p79 = por %p77, %p78
      %p80 = scmp.ne.s32.totalorder %s66, %s67
      %p81 = scmp.eq.s32.totalorder %s21, 7
      %p82 = por %p80, %p81
      %p84 = scmp.ne.s32.totalorder %s67, %s83
      %p85 = scmp.eq.s32.totalorder %s21, 0
      %p86 = por %p84, %p85
      %s87 = ssub.s32 %s23, %s30
      %p88 = scmp.eq.s32.totalorder %s87, 0
      %s90 = sadd.s32 %s89, 1
      %s91 = scalar_select %p88, %s89, %s90
      %p94 = pneg %p88
      %p95 = scmp.eq.s32.totalorder %s15, 7
      %p96 = por %p94, %p95
      %p97 = scmp.ne.s32.totalorder %s89, %s92
      %p98 = scmp.eq.s32.totalorder %s15, 0
      %p99 = por %p97, %p98
      %p100 = scmp.ne.s32.totalorder %s89, %s92
      %p101 = scmp.eq.s32.totalorder %s20, 7
      %p102 = por %p100, %p101
      %p103 = scmp.ne.s32.totalorder %s92, %s93
      %p104 = scmp.eq.s32.totalorder %s20, 0
      %p105 = por %p103, %p104
      %p106 = scmp.ne.s32.totalorder %s92, %s93
      %p107 = scmp.eq.s32.totalorder %s21, 7
      %p108 = por %p106, %p107
      %p110 = scmp.ne.s32.totalorder %s93, %s109
      %p111 = scmp.eq.s32.totalorder %s21, 0
      %p112 = por %p110, %p111
      %s113 = ssub.s32 %s23, %s30
      %p114 = scmp.eq.s32.totalorder %s113, 0
      %s116 = sadd.s32 %s115, 1
      %s117 = scalar_select %p114, %s115, %s116
      %p120 = pneg %p114
      %p121 = scmp.eq.s32.totalorder %s15, 7
      %p122 = por %p120, %p121
      %p123 = scmp.ne.s32.totalorder %s115, %s118
      %p124 = scmp.eq.s32.totalorder %s15, 0
      %p125 = por %p123, %p124
      %p126 = scmp.ne.s32.totalorder %s115, %s118
      %p127 = scmp.eq.s32.totalorder %s20, 7
      %p128 = por %p126, %p127
      %p129 = scmp.ne.s32.totalorder %s118, %s119
      %p130 = scmp.eq.s32.totalorder %s20, 0
      %p131 = por %p129, %p130
      %p132 = scmp.ne.s32.totalorder %s118, %s119
      %p133 = scmp.eq.s32.totalorder %s21, 7
      %p134 = por %p132, %p133
      %p136 = scmp.ne.s32.totalorder %s119, %s135
      %p137 = scmp.eq.s32.totalorder %s21, 0
      %p138 = por %p136, %p137
      %s139 = ssub.s32 %s23, %s30
      %p140 = scmp.eq.s32.totalorder %s139, 0
      %s142 = sadd.s32 %s141, 1
      %s143 = scalar_select %p140, %s141, %s142
      %p146 = pneg %p140
      %p147 = scmp.eq.s32.totalorder %s15, 7
      %p148 = por %p146, %p147
      %p149 = scmp.ne.s32.totalorder %s141, %s144
      %p150 = scmp.eq.s32.totalorder %s15, 0
      %p151 = por %p149, %p150
      %p152 = scmp.ne.s32.totalorder %s141, %s144
      %p153 = scmp.eq.s32.totalorder %s20, 7
      %p154 = por %p152, %p153
      %p155 = scmp.ne.s32.totalorder %s144, %s145
      %p156 = scmp.eq.s32.totalorder %s20, 0
      %p157 = por %p155, %p156
      %p158 = scmp.ne.s32.totalorder %s144, %s145
      %p159 = scmp.eq.s32.totalorder %s21, 7
      %p160 = por %p158, %p159
      %p162 = scmp.ne.s32.totalorder %s145, %s161
      %p163 = scmp.eq.s32.totalorder %s21, 0
      %p164 = por %p162, %p163
      %s166 = sadd.s32 %s165, 1
      %p169 = scmp.eq.s32.totalorder %s15, 7
      %p170 = scmp.ne.s32.totalorder %s165, %s167
      %p171 = scmp.eq.s32.totalorder %s15, 0
      %p172 = por %p170, %p171
      %p173 = scmp.ne.s32.totalorder %s165, %s167
      %p174 = scmp.eq.s32.totalorder %s20, 7
      %p175 = por %p173, %p174
      %p176 = scmp.ne.s32.totalorder %s167, %s168
      %p177 = scmp.eq.s32.totalorder %s20, 0
      %p178 = por %p176, %p177
      %p179 = scmp.ne.s32.totalorder %s167, %s168
      %p180 = scmp.eq.s32.totalorder %s21, 7
      %p181 = por %p179, %p180
      %p183 = scmp.ne.s32.totalorder %s168, %s182
      %p184 = scmp.eq.s32.totalorder %s21, 0
      %p185 = por %p183, %p184
      %s186 = ssub.s32 %s22, %s34
      %p187 = scmp.eq.s32.totalorder %s186, 0
      %s189 = sadd.s32 %s188, 1
      %s190 = scalar_select %p187, %s188, %s189
      %p193 = pneg %p187
      %p194 = scmp.eq.s32.totalorder %s15, 7
      %p195 = por %p193, %p194
      %p196 = scmp.ne.s32.totalorder %s188, %s191
      %p197 = scmp.eq.s32.totalorder %s15, 0
      %p198 = por %p196, %p197
      %p199 = scmp.ne.s32.totalorder %s188, %s191
      %p200 = scmp.eq.s32.totalorder %s20, 7
      %p201 = por %p199, %p200
      %p202 = scmp.ne.s32.totalorder %s191, %s192
      %p203 = scmp.eq.s32.totalorder %s20, 0
      %p204 = por %p202, %p203
      %p205 = scmp.ne.s32.totalorder %s191, %s192
      %p206 = scmp.eq.s32.totalorder %s21, 7
      %p207 = por %p205, %p206
      %p209 = scmp.ne.s32.totalorder %s192, %s208
      %p210 = scmp.eq.s32.totalorder %s21, 0
      %p211 = por %p209, %p210
      %p212 = scmp.le.s32.totalorder 1, %s15
      %p213 = scmp.lt.s32.totalorder %s15, 9
      %p214 = pnand %p212, %p213
      %p215 = pneg %p214
      // Predicated region
      $region9: #{tpu_custom_call.1} parent=5 // pred_check
        _
      $region10: #{tpu_custom_call.1} parent=5 // pred_check_branch
        %217 = sbr.rel (%p214) target = $region12
      $region11: #{tpu_custom_call.1} parent=5 // pred_region
        %s218 = ssub.s32 %s15, 1
        // Predicated region
        $region13: #{tpu_custom_call.1} parent=11 // pred_check
          %p219 = pneg %p178
        $region14: #{tpu_custom_call.1} parent=11 // pred_check_branch
          %221 = sbr.rel (%p219) target = $region16
        $region15: #{tpu_custom_call.1} parent=11 // pred_region
          _
        $region16: #{tpu_custom_call.1} parent=11 // pred_fallthru
          _
      $region12: #{tpu_custom_call.1} parent=5 // pred_fallthru
        _
      %p222 = scmp.lt.s32.totalorder %s15, 8
      // Predicated region
      $region17: #{tpu_custom_call.1} parent=5 // pred_check
        %p223 = pneg %p222
      $region18: #{tpu_custom_call.1} parent=5 // pred_check_branch
        %225 = sbr.rel (%p223) target = $region20
      $region19: #{tpu_custom_call.1} parent=5 // pred_region
        // Predicated region
        $region21: #{tpu_custom_call.1} parent=19 // pred_check
          %p226 = pneg %p47
        $region22: #{tpu_custom_call.1} parent=19 // pred_check_branch
          %228 = sbr.rel (%p226) target = $region24
        $region23: #{tpu_custom_call.1} parent=19 // pred_region
          %p229 = scmp.lt.s32.totalorder %s22, 1
          %s230 = scalar_select %p229, %s22, 1
          %s231 = smul.addr %s230, 4
          %s232 = scalar_lea.vmem %s0, %s231
        $region24: #{tpu_custom_call.1} parent=19 // pred_fallthru
          _
        // Predicated region
        $region25: #{tpu_custom_call.1} parent=19 // pred_check
          %p233 = pneg %p73
        $region26: #{tpu_custom_call.1} parent=19 // pred_check_branch
          %235 = sbr.rel (%p233) target = $region28
        $region27: #{tpu_custom_call.1} parent=19 // pred_region
          %p236 = scmp.lt.s32.totalorder %s22, 1
          %s237 = scalar_select %p236, %s22, 1
          %s238 = scalar_lea.vmem %s1, %s237
        $region28: #{tpu_custom_call.1} parent=19 // pred_fallthru
          _
        // Predicated region
        $region29: #{tpu_custom_call.1} parent=19 // pred_check
          %p239 = pneg %p99
        $region30: #{tpu_custom_call.1} parent=19 // pred_check_branch
          %241 = sbr.rel (%p239) target = $region32
        $region31: #{tpu_custom_call.1} parent=19 // pred_region
          %p242 = scmp.lt.s32.totalorder %s23, 3
          %s243 = scalar_select %p242, %s23, 3
          %s244 = smul.addr %s243, 4
          %s245 = smul.addr %s244, 4
          %s246 = scalar_lea.vmem %s2, %s245
        $region32: #{tpu_custom_call.1} parent=19 // pred_fallthru
          _
        // Predicated region
        $region33: #{tpu_custom_call.1} parent=19 // pred_check
          %p247 = pneg %p125
        $region34: #{tpu_custom_call.1} parent=19 // pred_check_branch
          %249 = sbr.rel (%p247) target = $region36
        $region35: #{tpu_custom_call.1} parent=19 // pred_region
          %p250 = scmp.lt.s32.totalorder %s23, 3
          %s251 = scalar_select %p250, %s23, 3
          %s252 = scalar_lea.vmem %s3, %s251
        $region36: #{tpu_custom_call.1} parent=19 // pred_fallthru
          _
        // Predicated region
        $region37: #{tpu_custom_call.1} parent=19 // pred_check
          %p253 = pneg %p151
        $region38: #{tpu_custom_call.1} parent=19 // pred_check_branch
          %255 = sbr.rel (%p253) target = $region40
        $region39: #{tpu_custom_call.1} parent=19 // pred_region
          %p256 = scmp.lt.s32.totalorder %s23, 3
          %s257 = scalar_select %p256, %s23, 3
          %s258 = smul.addr %s257, 4
          %s259 = scalar_lea.vmem %s4, %s258
        $region40: #{tpu_custom_call.1} parent=19 // pred_fallthru
          _
      $region20: #{tpu_custom_call.1} parent=5 // pred_fallthru
        _
      %p260 = scmp.le.s32.totalorder 1, %s15
      %p261 = scmp.lt.s32.totalorder %s15, 9
      %p262 = pnand %p260, %p261
      %p263 = pneg %p262
      // Predicated region
      $region41: #{tpu_custom_call.1} parent=5 // pred_check
        _
      $region42: #{tpu_custom_call.1} parent=5 // pred_check_branch
        %265 = sbr.rel (%p262) target = $region44
      $region43: #{tpu_custom_call.1} parent=5 // pred_region
        %s266 = ssub.s32 %s15, 1
        %p267 = scmp.lt.s32.totalorder %s24, 1
        %s268 = scalar_select %p267, %s24, 1
        %s269 = smul.addr %s268, 4
        %s270 = scalar_lea.vmem %s0, %s269
        %p271 = pneg %p53
        %p272 = pneg %p50
        %p273 = scmp.lt.s32.totalorder %s24, 1
        %s274 = scalar_select %p273, %s24, 1
        %s275 = scalar_lea.vmem %s1, %s274
        %p276 = pneg %p79
        %p277 = pneg %p76
        %p278 = scmp.lt.s32.totalorder %s25, 3
        %s279 = scalar_select %p278, %s25, 3
        %s280 = smul.addr %s279, 4
        %s281 = smul.addr %s280, 4
        %s282 = scalar_lea.vmem %s2, %s281
        %p283 = pneg %p105
        %p284 = pneg %p102
        %p285 = scmp.lt.s32.totalorder %s25, 3
        %s286 = scalar_select %p285, %s25, 3
        %s287 = scalar_lea.vmem %s3, %s286
        %p288 = pneg %p131
        %p289 = pneg %p128
        %p290 = scmp.lt.s32.totalorder %s25, 3
        %s291 = scalar_select %p290, %s25, 3
        %s292 = smul.addr %s291, 4
        %s293 = scalar_lea.vmem %s4, %s292
        %p294 = pneg %p157
        %p295 = pneg %p154
        %p296 = pneg %p178
        %p297 = pneg %p175
        %p298 = pneg %p204
        %p299 = pneg %p201
        %s300 = sand.u32 %s191, 1
        %s301 = scalar_lea.sflag [#allocation4], %s300
        %s302 = sand.u32 %s191, 1
        %s303 = smul.addr %s302, 8
        %s304 = scalar_lea.vmem [#allocation3], %s303
        %p305 = scmp.lt.s32.totalorder %s24, 1
        %s306 = scalar_select %p305, %s24, 1
        %s307 = smul.addr %s306, 4
        %s308 = scalar_lea.vmem %s0, %s307
        %p309 = scmp.lt.s32.totalorder %s24, 1
        %s310 = scalar_select %p309, %s24, 1
        %s311 = scalar_lea.vmem %s1, %s310
        %p312 = scmp.lt.s32.totalorder %s25, 3
        %s313 = scalar_select %p312, %s25, 3
        %s314 = smul.addr %s313, 4
        %s315 = smul.addr %s314, 4
        %s316 = scalar_lea.vmem %s2, %s315
        %p317 = scmp.lt.s32.totalorder %s25, 3
        %s318 = scalar_select %p317, %s25, 3
        %s319 = scalar_lea.vmem %s3, %s318
        %p320 = scmp.lt.s32.totalorder %s25, 3
        %s321 = scalar_select %p320, %s25, 3
        %s322 = smul.addr %s321, 4
        %s323 = scalar_lea.vmem %s4, %s322
        %p325 = scmp.eq.s32.totalorder %s25, 0
        // Predicated region
        $region45: #{tpu_custom_call.1} parent=43 // pred_check
          %p326 = pneg %p325
        $region46: #{tpu_custom_call.1} parent=43 // pred_check_branch
          %328 = sbr.rel (%p326) target = $region48
        $region47: #{tpu_custom_call.1} parent=43 // pred_region
          %vm329 = vcmask 261120
          %330 = vst.msk [vmem:[#allocation2] sm:$0xff] %vm329, 0.0
        $region48: #{tpu_custom_call.1} parent=43 // pred_fallthru
          _
        %v331 = vld [vmem:[%s308] sm:$0xf]
        %v332 = vld [vmem:[%s311] sm:$0x1]
        %v333 = vld [vmem:[%s316] sm:$0xf]
        %v334 = vld [vmem:[%s316 + $0x4] sm:$0xf]
        %v335 = vld [vmem:[%s316 + $0x8] sm:$0xf]
        %v336 = vld [vmem:[%s316 + $0xc] sm:$0xf]
        %v337 = vld [vmem:[%s319] sm:$0x1]
        %v339 = vlaneseq
        %v340 = vshrl.u32 %v339, 7
        %v341 = vsub.s32 0, %v340
        %v342 = vrot.slane %v337, %v341
        %v348 = vunpack.c.l.b16 %v333
        %v349 = vunpack.c.l.b16 %v334
        %v350 = vunpack.c.l.b16 %v335
        %v351 = vunpack.c.l.b16 %v336
        %v352 = vpack.c.b16 %v349, %v348
        %v353 = vpack.c.b16 %v351, %v350
        %vm356 = vcmask 261120
        %v358 = vsel %vm356, %v331, 0
        %360 = vmatprep.subr.bf16.mxu0 0
        %361 = vmatpush1.bf16.msra.mxu0 0
        %362 = vmatprep.subr.bf16.mxu0 0
        %363 = vmatpush1.bf16.msra.mxu0 0
        %364 = vmatprep.subr.bf16.mxu0 0
        %365 = vmatpush1.bf16.msra.mxu0 0
        %366 = vmatprep.subr.bf16.mxu0 0
        %367 = vmatpush1.bf16.msra.mxu0 0
        %368 = vmatprep.subr.bf16.mxu0 0
        %369 = vmatpush1.bf16.msra.mxu0 0
        %370 = vmatprep.subr.bf16.mxu0 0
        %371 = vmatpush1.bf16.msra.mxu0 0
        %372 = vmatprep.subr.bf16.mxu0 0
        %373 = vmatpush1.bf16.msra.mxu0 %v353
        %374 = vmatprep.subr.bf16.mxu0 0
        %375 = vmatpush1.bf16.msra.mxu0 %v352
        %376 = vmatprep.subr.bf16.mxu0 0
        %377 = vmatpush2.bf16.msra.mxu0 0
        %378 = vmatprep.subr.bf16.mxu0 0
        %379 = vmatpush2.bf16.msra.mxu0 0
        %380 = vmatprep.subr.bf16.mxu0 0
        %381 = vmatpush2.bf16.msra.mxu0 0
        %382 = vmatprep.subr.bf16.mxu0 0
        %383 = vmatpush2.bf16.msra.mxu0 0
        %384 = vmatprep.subr.bf16.mxu0 0
        %385 = vmatpush2.bf16.msra.mxu0 0
        %386 = vmatprep.subr.bf16.mxu0 0
        %387 = vmatpush2.bf16.msra.mxu0 0
        %388 = vmatprep.subr.bf16.mxu0 0
        %389 = vmatpush2.bf16.msra.mxu0 0
        %390 = vmatprep.subr.bf16.mxu0 0
        %391 = vmatpush2.bf16.msra.mxu0 0
        %392 = vmatprep.mubr.bf16.mxu0 0
        %393 = vmatmul.mubr.bf16.gmra.mxu0 %v358
        %v394 = vpop.f32.mrf.mxu0
        %v395 = vadd.f32 %v342, %v394
        %v396 = vpop.f32.mrf.mxu0
        %v397 = vpop.f32.mrf.mxu0
        %v398 = vpop.f32.mrf.mxu0
        %399 = vdwg.mxu0
        %v400 = vpack.c.bf16 %v395, %v395
        %402 = vrot.lane.b32.xlu0 %v400, 120
        %v403 = vpop.permute.xlu0 %402
        %vm404 = vcmask 64512
        %v406 = vsel %vm404, %v400, 0
        %v409 = vsel %vm404, %v403, 0
        %411 = vmatprep.subr.bf16.mxu0 0
        %412 = vmatpush1.bf16.xpose.msra.mxu0 0
        %413 = vmatprep.subr.bf16.mxu0 0
        %414 = vmatpush1.bf16.xpose.msra.mxu0 0
        %415 = vmatprep.subr.bf16.mxu0 0
        %416 = vmatpush1.bf16.xpose.msra.mxu0 0
        %417 = vmatprep.subr.bf16.mxu0 0
        %418 = vmatpush1.bf16.xpose.msra.mxu0 0
        %419 = vmatprep.subr.bf16.mxu0 0
        %420 = vmatpush1.bf16.xpose.msra.mxu0 0
        %421 = vmatprep.subr.bf16.mxu0 0
        %422 = vmatpush1.bf16.xpose.msra.mxu0 0
        %423 = vmatprep.subr.bf16.mxu0 0
        %424 = vmatpush1.bf16.xpose.msra.mxu0 0
        %425 = vmatprep.subr.bf16.mxu0 0
        %426 = vmatpush1.bf16.xpose.msra.mxu0 %v409
        %427 = vmatprep.subr.bf16.mxu0 0
        %428 = vmatpush2.bf16.xpose.msra.mxu0 0
        %429 = vmatprep.subr.bf16.mxu0 0
        %430 = vmatpush2.bf16.xpose.msra.mxu0 0
        %431 = vmatprep.subr.bf16.mxu0 0
        %432 = vmatpush2.bf16.xpose.msra.mxu0 0
        %433 = vmatprep.subr.bf16.mxu0 0
        %434 = vmatpush2.bf16.xpose.msra.mxu0 0
        %435 = vmatprep.subr.bf16.mxu0 0
        %436 = vmatpush2.bf16.xpose.msra.mxu0 0
        %437 = vmatprep.subr.bf16.mxu0 0
        %438 = vmatpush2.bf16.xpose.msra.mxu0 0
        %439 = vmatprep.subr.bf16.mxu0 0
        %440 = vmatpush2.bf16.xpose.msra.mxu0 0
        %441 = vmatprep.subr.bf16.mxu0 0
        %442 = vmatpush2.bf16.xpose.msra.mxu0 0
        %443 = vmatprep.mubr.bf16.mxu0 0
        %444 = vmatmul.mubr.bf16.gmra.mxu0 %v406
        %v445 = vpop.f32.mrf.mxu0
        %v446 = vadd.f32 0.0, %v445
        %v447 = vpop.f32.mrf.mxu0
        %v448 = vpop.f32.mrf.mxu0
        %v449 = vpop.f32.mrf.mxu0
        %450 = vdwg.mxu0
        %vm451 = vcmp.eq.s32.totalorder %v332, 0
        %v452 = vsel %vm451, 1, 0
        %v453 = vlaneseq
        %v454 = vshrl.u32 %v453, 7
        %v455 = vsub.s32 0, %v454
        %v456 = vrot.slane %v452, %v455
        %vm457 = vcmp.eq.s32.totalorder %v456, 1
        %v458 = vsel %vm457, -1e+10, %v446
        %v459 = vsel %vm404, %v458, -inf
        %460 = vmax.xlane.f32.xlu0 %v459
        %v461 = vpop.xlane.xlu0 %460
        %v462 = vsub.f32 %v458, %v461
        %v463 = vmul.f32 %v462, 1.442695
        %v464 = vpow.pop %v463
        %v465 = vsel %vm404, %v464, 0.0
        %466 = vadd.xlane.f32.xlu0 %v465
        %v467 = vpop.xlane.xlu0 %466
        %v468 = vrcp.pop %v467
        %v469 = vmul.f32 %v464, %v468
        %v470 = vpack.c.bf16 %v469, %v469
        %471 = vrot.lane.b32.xlu0 %v400, 112
        %v472 = vpop.permute.xlu0 %471
        %v474 = vsel %vm404, %v470, 0
        %vm476 = vcmask 1043456
        %v478 = vsel %vm476, %v472, 0
        %480 = vmatprep.subr.bf16.mxu0 0
        %481 = vmatpush1.bf16.msra.mxu0 0
        %482 = vmatprep.subr.bf16.mxu0 0
        %483 = vmatpush1.bf16.msra.mxu0 0
        %484 = vmatprep.subr.bf16.mxu0 0
        %485 = vmatpush1.bf16.msra.mxu0 0
        %486 = vmatprep.subr.bf16.mxu0 0
        %487 = vmatpush1.bf16.msra.mxu0 0
        %488 = vmatprep.subr.bf16.mxu0 0
        %489 = vmatpush1.bf16.msra.mxu0 0
        %490 = vmatprep.subr.bf16.mxu0 0
        %491 = vmatpush1.bf16.msra.mxu0 0
        %492 = vmatprep.subr.bf16.mxu0 0
        %493 = vmatpush1.bf16.msra.mxu0 0
        %494 = vmatprep.subr.bf16.mxu0 0
        %495 = vmatpush1.bf16.msra.mxu0 %v478
        %496 = vmatprep.subr.bf16.mxu0 0
        %497 = vmatpush2.bf16.msra.mxu0 0
        %498 = vmatprep.subr.bf16.mxu0 0
        %499 = vmatpush2.bf16.msra.mxu0 0
        %500 = vmatprep.subr.bf16.mxu0 0
        %501 = vmatpush2.bf16.msra.mxu0 0
        %502 = vmatprep.subr.bf16.mxu0 0
        %503 = vmatpush2.bf16.msra.mxu0 0
        %504 = vmatprep.subr.bf16.mxu0 0
        %505 = vmatpush2.bf16.msra.mxu0 0
        %506 = vmatprep.subr.bf16.mxu0 0
        %507 = vmatpush2.bf16.msra.mxu0 0
        %508 = vmatprep.subr.bf16.mxu0 0
        %509 = vmatpush2.bf16.msra.mxu0 0
        %510 = vmatprep.subr.bf16.mxu0 0
        %511 = vmatpush2.bf16.msra.mxu0 0
        %512 = vmatprep.mubr.bf16.mxu0 0
        %513 = vmatmul.mubr.bf16.gmra.mxu0 %v474
        %v514 = vpop.f32.mrf.mxu0
        %v515 = vadd.f32 0.0, %v514
        %v516 = vpop.f32.mrf.mxu0
        %v517 = vpop.f32.mrf.mxu0
        %v518 = vpop.f32.mrf.mxu0
        %519 = vdwg.mxu0
        %v520 = vld [vmem:[#allocation2] sm:$0xff]
        %v521 = vpack.c.bf16 %v515, %v515
        %v522 = vld [vmem:[%s323] sm:$0xf]
        %v524 = vsel %vm404, %v521, 0
        %v527 = vsel %vm476, %v522, 0
        %529 = vmatprep.subr.bf16.mxu0 0
        %530 = vmatpush1.bf16.msra.mxu0 0
        %531 = vmatprep.subr.bf16.mxu0 0
        %532 = vmatpush1.bf16.msra.mxu0 0
        %533 = vmatprep.subr.bf16.mxu0 0
        %534 = vmatpush1.bf16.msra.mxu0 0
        %535 = vmatprep.subr.bf16.mxu0 0
        %536 = vmatpush1.bf16.msra.mxu0 0
        %537 = vmatprep.subr.bf16.mxu0 0
        %538 = vmatpush1.bf16.msra.mxu0 0
        %539 = vmatprep.subr.bf16.mxu0 0
        %540 = vmatpush1.bf16.msra.mxu0 0
        %541 = vmatprep.subr.bf16.mxu0 0
        %542 = vmatpush1.bf16.msra.mxu0 0
        %543 = vmatprep.subr.bf16.mxu0 0
        %544 = vmatpush1.bf16.msra.mxu0 %v527
        %545 = vmatprep.subr.bf16.mxu0 0
        %546 = vmatpush2.bf16.msra.mxu0 0
        %547 = vmatprep.subr.bf16.mxu0 0
        %548 = vmatpush2.bf16.msra.mxu0 0
        %549 = vmatprep.subr.bf16.mxu0 0
        %550 = vmatpush2.bf16.msra.mxu0 0
        %551 = vmatprep.subr.bf16.mxu0 0
        %552 = vmatpush2.bf16.msra.mxu0 0
        %553 = vmatprep.subr.bf16.mxu0 0
        %554 = vmatpush2.bf16.msra.mxu0 0
        %555 = vmatprep.subr.bf16.mxu0 0
        %556 = vmatpush2.bf16.msra.mxu0 0
        %557 = vmatprep.subr.bf16.mxu0 0
        %558 = vmatpush2.bf16.msra.mxu0 0
        %559 = vmatprep.subr.bf16.mxu0 0
        %560 = vmatpush2.bf16.msra.mxu0 0
        %561 = vmatprep.mubr.bf16.mxu0 0
        %562 = vmatmul.mubr.bf16.gmra.mxu0 %v524
        %v563 = vpop.f32.mrf.mxu0
        %v564 = vadd.f32 0.0, %v563
        %v565 = vpop.f32.mrf.mxu0
        %v566 = vpop.f32.mrf.mxu0
        %v567 = vpop.f32.mrf.mxu0
        %568 = vdwg.mxu0
        %v569 = vadd.f32 %v520, %v564
        %570 = vst.msk [vmem:[#allocation2] sm:$0xff] %vm356, %v569
        %p571 = scmp.eq.s32.totalorder %s25, 3
        // Predicated region
        $region49: #{tpu_custom_call.1} parent=43 // pred_check
          %p572 = pneg %p571
        $region50: #{tpu_custom_call.1} parent=43 // pred_check_branch
          %574 = sbr.rel (%p572) target = $region52
        $region51: #{tpu_custom_call.1} parent=43 // pred_region
          %v575 = vld [vmem:[#allocation2] sm:$0xff]
          %v576 = vld [vmem:[%s5] sm:$0x1]
          %v578 = vlaneseq
          %v579 = vshrl.u32 %v578, 7
          %v580 = vsub.s32 0, %v579
          %v581 = vrot.slane %v576, %v580
          %v583 = vadd.f32 %v575, %v581
          %584 = vst.msk [vmem:[%s304] sm:$0xff] %vm356, %v583
        $region52: #{tpu_custom_call.1} parent=43 // pred_fallthru
          _
        %s585 = sand.u32 %s191, 1
        %s586 = scalar_lea.sflag [#allocation4], %s585
        %s587 = sand.u32 %s191, 1
        %s588 = smul.addr %s587, 8
        %s589 = scalar_lea.vmem [#allocation3], %s588
        // Predicated region
        $region53: #{tpu_custom_call.1} parent=43 // pred_check
          %p590 = pneg %p201
        $region54: #{tpu_custom_call.1} parent=43 // pred_check_branch
          %592 = sbr.rel (%p590) target = $region56
        $region55: #{tpu_custom_call.1} parent=43 // pred_region
          %s594 = ssub.s32 128, 128
          %595 = vsyncadd %s586, %s594
          %s596 = smul.addr %s24, 128
          %s597 = scalar_lea.hbm %s6, %s596
          %s599 = sshll.u32 %s589, 4
          %s600 = int_to_ptr.vmem [resolvable:$true] %s599
          %602 = dma.vmem_to_hbm [thread:$0]  %s600, 128, %s597, %s586
        $region56: #{tpu_custom_call.1} parent=43 // pred_fallthru
          _
      $region44: #{tpu_custom_call.1} parent=5 // pred_fallthru
        _
      %p603 = scmp.le.s32.totalorder 2, %s15
      // Predicated region
      $region57: #{tpu_custom_call.1} parent=5 // pred_check
        %p604 = pneg %p603
      $region58: #{tpu_custom_call.1} parent=5 // pred_check_branch
        %606 = sbr.rel (%p604) target = $region60
      $region59: #{tpu_custom_call.1} parent=5 // pred_region
        %s607 = ssub.s32 %s15, 2
        // Predicated region
        $region61: #{tpu_custom_call.1} parent=59 // pred_check
          %p608 = pneg %p207
        $region62: #{tpu_custom_call.1} parent=59 // pred_check_branch
          %610 = sbr.rel (%p608) target = $region64
        $region63: #{tpu_custom_call.1} parent=59 // pred_region
          %s611 = sand.u32 %s192, 1
          %s612 = scalar_lea.sflag [#allocation4], %s611
          %s613 = sand.u32 %s192, 1
          %s614 = smul.addr %s613, 8
          %s615 = scalar_lea.vmem [#allocation3], %s614
          %616 = dma.done %s612, 128
        $region64: #{tpu_custom_call.1} parent=59 // pred_fallthru
          _
      $region60: #{tpu_custom_call.1} parent=5 // pred_fallthru
        _
    $region6: #{tpu_custom_call.1} parent=1 // loop_footer
      %s19 = sadd.s32 1, %s15
    $region7: #{tpu_custom_call.1} parent=1 // loop_footer_branch
      %14 = sbr.rel target = $region3
    $region8: #{tpu_custom_call.1} parent=1 // loop_exit
      _
    %617 = vsyncpa [#allocation4], 1
    %s618 = scalar_lea.sflag [#allocation4], 1
    %619 = vsyncpa %s618, 1

</llo_original>
